<compile_context>
chip_gen: v6e
topology: v6e:2x2x1
jax: 0.10.0
libtpu: 0.0.40
codegen_flags: <defaults>
</compile_context>

<pallas_src>
import functools
import math

import jax
import jax.numpy as jnp
from jax.experimental import pallas as pl
from jax.experimental.pallas import tpu as pltpu

_LANE = 128                      # lane width (last-dim alignment)
_SUBLANE = 8                     # f32 sublane alignment
_TILE_B_MAX = 4096               # rows per grid step (cap)
_MIN_SPLIT_ROWS = 512            # keep >=2 grid steps once batch >= 2*this
_FALLBACK_VMEM_CAP = 64 * 1024 * 1024   # assume smallest (v7x) if query fails


def _round_up(n, m):
    return ((n + m - 1) // m) * m


@functools.lru_cache(maxsize=None)
def _vmem_budgets():
    """Generation-aware (tile_budget, vmem_limit) in bytes."""
    try:
        cap = int(pltpu.get_tpu_info().vmem_capacity_bytes)
        if cap <= 0:
            cap = _FALLBACK_VMEM_CAP
    except Exception:
        cap = _FALLBACK_VMEM_CAP
    # v5e/v6e (128 MiB): limit 96 MiB, tile budget 48 MiB.
    # v7x    (64 MiB):  limit 48 MiB, tile budget 32 MiB.
    vmem_limit = min((cap * 3) // 4, 96 * 1024 * 1024)
    tile_budget = min(cap // 2, 48 * 1024 * 1024)
    return tile_budget, vmem_limit


def _choose_tile_b(batch, d, h_pad, tile_budget):
    """Largest batch tile (multiple of 8) whose VMEM footprint fits the budget."""
    b_al = _round_up(max(batch, 1), _SUBLANE)
    tile = min(_TILE_B_MAX, b_al)
    # Prefer >=2 grid steps for moderate/large batches so the "parallel" batch
    # axis can be split across v7x's two TensorCores; ~neutral on v5e/v6e.
    if b_al >= 2 * _MIN_SPLIT_ROWS:
        tile = min(tile, _round_up(-(-b_al // 2), _SUBLANE))
    tile = max(tile, _SUBLANE)

    def footprint(t):
        return 4 * (
            2 * t * d            # x tile, double-buffered (f32-sized: conservative for bf16)
            + d * h_pad          # W1, resident, single-buffered
            + 2 * h_pad          # b1 + w2 row, resident
            + 2 * t * h_pad      # f32 hidden + epilogue temporaries
            + 2 * t * _LANE      # (t, 1) output tile, double-buffered, lane-padded
        )

    while tile > _SUBLANE and footprint(tile) > tile_budget:
        tile = max(_SUBLANE, _round_up(tile // 2, _SUBLANE))
    return tile


def _js_kernel(x_ref, w1_ref, b1_ref, w2_ref, b2_ref, o_ref, *, apply_sigmoid):
    # Layer 1 on the MXU: hidden = relu(x @ W1 + b1)            (tile_b, H_pad)
    h = jnp.dot(x_ref[...], w1_ref[...], preferred_element_type=jnp.float32)
    h = jnp.maximum(h + b1_ref[...], 0.0)          # (1, H_pad) sublane broadcast
    # Layer 2 (output width 1): VPU multiply + XLU lane reduction instead of a
    # (tile_b, H) x (H, 1) matmul that would use <1% of the MXU.
    logits = jnp.sum(h * w2_ref[...], axis=-1, keepdims=True)   # (tile_b, 1)
    logits = logits + b2_ref[0, 0]                 # scalar bias from SMEM
    out = jax.nn.sigmoid(logits) if apply_sigmoid else logits   # f32 epilogue
    o_ref[...] = out.astype(o_ref.dtype)


@functools.partial(jax.jit, static_argnames=("apply_sigmoid",))
def _forward_impl(x, w1, b1, w2, b2, *, apply_sigmoid):
    batch = x.shape[0]
    if x.ndim != 2:
        x = x.reshape(batch, -1)       # flatten (B, C, H, W, ...) -> (B, D)
    d = x.shape[1]
    h = w1.shape[1]

    # Don't force-upcast bf16 callers (halves x HBM bytes); everything else f32.
    if x.dtype == jnp.bfloat16:
        compute_dtype = jnp.bfloat16   # accuracy trade-off owned by the caller
    else:
        compute_dtype = jnp.float32
        x = x.astype(jnp.float32)

    # Only the (cheap, weight-sized) operands get padded: H up to a lane
    # multiple so the hidden activations and the epilogue are lane-dense.
    # x itself is never padded or copied.
    h_pad = _round_up(h, _LANE)
    w1p = w1.astype(compute_dtype)
    b1p = jnp.asarray(b1, jnp.float32).reshape(1, h)
    w2p = jnp.asarray(w2, jnp.float32).reshape(1, h)   # (H, 1) column -> (1, H) row
    if h_pad != h:
        w1p = jnp.pad(w1p, ((0, 0), (0, h_pad - h)))
        b1p = jnp.pad(b1p, ((0, 0), (0, h_pad - h)))
        w2p = jnp.pad(w2p, ((0, 0), (0, h_pad - h)))
    b2p = jnp.asarray(b2, jnp.float32).reshape(1, 1)

    tile_budget, vmem_limit = _vmem_budgets()
    tile_b = _choose_tile_b(batch, d, h_pad, tile_budget)
    grid = pl.cdiv(batch, tile_b)

    kernel = functools.partial(_js_kernel, apply_sigmoid=apply_sigmoid)
    out = pl.pallas_call(
        kernel,
        out_shape=jax.ShapeDtypeStruct((batch, 1), jnp.float32),
        grid_spec=pltpu.PrefetchScalarGridSpec(
            num_scalar_prefetch=0,
            grid=(grid,),
            in_specs=[
                # x: batch-tiled, full (unpadded) feature dim; ragged edge rows
                # are undefined and sliced off by the wrapper.
                pl.BlockSpec((tile_b, d), lambda i: (i, 0)),
                # Resident operands: whole-array VMEM, single-buffered, DMAed
                # once for the whole call (never re-fetched per grid step).
                pl.BlockSpec(memory_space=pltpu.MemorySpace.VMEM),   # W1
                pl.BlockSpec(memory_space=pltpu.MemorySpace.VMEM),   # b1
                pl.BlockSpec(memory_space=pltpu.MemorySpace.VMEM),   # w2 row
                pl.BlockSpec(memory_space=pltpu.MemorySpace.SMEM),   # b2 scalar
            ],
            out_specs=pl.BlockSpec((tile_b, 1), lambda i: (i, 0)),
        ),
        compiler_params=pltpu.CompilerParams(
            dimension_semantics=("parallel",),
            vmem_limit_bytes=int(vmem_limit),
        ),
    )(x, w1p, b1p, w2p, b2p)
    return out[:batch, 0]


def jensen_shannon_forward(x, params):
    """JensenShannon.forward: sigmoid(critic(x)), sigmoid applied inside the kernel."""
    w1, b1, w2, b2 = params
    return _forward_impl(x, w1, b1, w2, b2, apply_sigmoid=True)


def jensen_shannon_logits(x, params):
    """Raw critic logits (pre-sigmoid) — used for a numerically stable loss."""
    w1, b1, w2, b2 = params
    return _forward_impl(x, w1, b1, w2, b2, apply_sigmoid=False)


def jensen_shannon_loss(f, g, params):
    """Critic loss: -(E[log D(f)]/2 + E[log(1 - D(g))]/2).

    f and g each go through their own pallas_call (no concat copy of the
    activations), and the logs use log_sigmoid on logits for stability:
        log(sigmoid(z)) = log_sigmoid(z),  log(1 - sigmoid(z)) = log_sigmoid(-z).
    """
    zf = jensen_shannon_logits(f, params)
    zg = jensen_shannon_logits(g, params)
    objective = (jnp.mean(jax.nn.log_sigmoid(zf)) / 2.0
                 + jnp.mean(jax.nn.log_sigmoid(-zg)) / 2.0)
    return -objective


def jensen_shannon_distance(f, g, params):
    return jnp.log(2.0) - jensen_shannon_loss(f, g, params)


def init_params(key, in_features, hidden):
    """Deterministic PyTorch-style Linear init: U(-1/sqrt(fan_in), 1/sqrt(fan_in))."""
    k1, k2, k3, k4 = jax.random.split(key, 4)
    bound1 = 1.0 / math.sqrt(in_features)
    bound2 = 1.0 / math.sqrt(hidden)
    w1 = jax.random.uniform(k1, (in_features, hidden), jnp.float32,
                            minval=-bound1, maxval=bound1)
    b1 = jax.random.uniform(k2, (1, hidden), jnp.float32,
                            minval=-bound1, maxval=bound1)
    w2 = jax.random.uniform(k3, (hidden, 1), jnp.float32,
                            minval=-bound2, maxval=bound2)
    b2 = jax.random.uniform(k4, (1, 1), jnp.float32,
                            minval=-bound2, maxval=bound2)
    return w1, b1, w2, b2


if __name__ == "__main__":
    key = jax.random.PRNGKey(0)
    kf, kg, kx4, kp = jax.random.split(key, 4)

    # Small shapes: critic consumes flattened (B, D) samples; D = C*H*W of a
    # (B, 2, 4, 4) image batch so the 4-D path is exercised too.
    B, D, H = 8, 32, 32
    f = jax.random.normal(kf, (B, D), jnp.float32)
    g = jax.random.normal(kg, (B, D), jnp.float32)
    params = init_params(kp, D, H)
    w1, b1, w2, b2 = params

    # Forward (Pallas kernel)
    probs = jax.block_until_ready(jensen_shannon_forward(f, params))

    # Pure-JAX reference
    ref = jax.nn.sigmoid(jnp.maximum(f @ w1 + b1, 0.0) @ w2 + b2)[:, 0]
    assert probs.shape == (B,)
    assert jnp.allclose(probs, ref, atol=1e-5, rtol=1e-5), (probs, ref)
    assert jnp.all(jnp.isfinite(probs))
    assert jnp.all((probs >= 0.0) & (probs <= 1.0))

    # 4-D input with an odd batch size (exercises flatten + ragged batch tile).
    x4 = jax.random.normal(kx4, (3, 2, 4, 4), jnp.float32)      # 2*4*4 == D
    probs4 = jax.block_until_ready(jensen_shannon_forward(x4, params))
    x4_flat = x4.reshape(3, -1)
    ref4 = jax.nn.sigmoid(jnp.maximum(x4_flat @ w1 + b1, 0.0) @ w2 + b2)[:, 0]
    assert probs4.shape == (3,)
    assert jnp.allclose(probs4, ref4, atol=1e-5, rtol=1e-5), (probs4, ref4)

    # Critic loss / distance (f and g each through their own kernel call).
    loss = jax.block_until_ready(jensen_shannon_loss(f, g, params))
    dist = jax.block_until_ready(jensen_shannon_distance(f, g, params))
    dg = jensen_shannon_forward(g, params)
    ref_loss = -(jnp.log(ref).mean() / 2.0 + jnp.log1p(-dg).mean() / 2.0)
    assert jnp.allclose(loss, ref_loss, atol=1e-5, rtol=1e-5), (loss, ref_loss)
    assert jnp.isfinite(loss) and jnp.isfinite(dist)

    print("KERNEL_OK")
</pallas_src>

<mosaic_0001>
module attributes {stable_mosaic.version = 11 : i64} {
  func.func @_js_kernel(%arg0: i32, %arg1: memref<8x32xf32, #tpu.memory_space<vmem>>, %arg2: memref<32x128xf32, #tpu.memory_space<vmem>>, %arg3: memref<1x128xf32, #tpu.memory_space<vmem>>, %arg4: memref<1x128xf32, #tpu.memory_space<vmem>>, %arg5: memref<1x1xf32, #tpu.memory_space<smem>>, %arg6: memref<8x1xf32, #tpu.memory_space<vmem>>) attributes {dimension_semantics = [#tpu.dimension_semantics<parallel>], iteration_bounds = array<i64: 1>, scalar_prefetch = 0 : i64, scratch_operands = 0 : i64, tpu.core_type = #tpu.core_type<tc>, window_params = [{transform_indices = @transform_0, window_bounds = array<i64: 8, 32>}, {pipeline_mode = #tpu.pipeline_mode<synchronous>, transform_indices = @transform_1, window_bounds = array<i64: 32, 128>}, {pipeline_mode = #tpu.pipeline_mode<synchronous>, transform_indices = @transform_2, window_bounds = array<i64: 1, 128>}, {pipeline_mode = #tpu.pipeline_mode<synchronous>, transform_indices = @transform_3, window_bounds = array<i64: 1, 128>}, {transform_indices = @transform_4, window_bounds = array<i64: 1, 1>}, {transform_indices = @transform_5, window_bounds = array<i64: 8, 1>}]} {
    %c0 = arith.constant 0 : index
    %c0_0 = arith.constant 0 : index
    %0 = vector.load %arg1[%c0, %c0_0] : memref<8x32xf32, #tpu.memory_space<vmem>>, vector<8x32xf32>
    %c0_1 = arith.constant 0 : index
    %c0_2 = arith.constant 0 : index
    %1 = vector.load %arg2[%c0_1, %c0_2] : memref<32x128xf32, #tpu.memory_space<vmem>>, vector<32x128xf32>
    %cst = arith.constant dense<0.000000e+00> : vector<8x128xf32>
    %2 = tpu.matmul %0, %1, %cst {dimension_numbers = #tpu.dot_dimension_numbers<[1], [0], [0], [1], [0, 0, 1, 1], [], []>} : vector<8x32xf32>, vector<32x128xf32>, vector<8x128xf32> -> vector<8x128xf32>
    %c0_3 = arith.constant 0 : index
    %c0_4 = arith.constant 0 : index
    %3 = vector.load %arg3[%c0_3, %c0_4] : memref<1x128xf32, #tpu.memory_space<vmem>>, vector<1x128xf32>
    %4 = vector.broadcast %3 : vector<1x128xf32> to vector<8x128xf32>
    %5 = arith.addf %2, %4 : vector<8x128xf32>
    %cst_5 = arith.constant 0.000000e+00 : f32
    %6 = vector.broadcast %cst_5 : f32 to vector<8x128xf32>
    %7 = arith.maximumf %5, %6 : vector<8x128xf32>
    %c0_6 = arith.constant 0 : index
    %c0_7 = arith.constant 0 : index
    %8 = vector.load %arg4[%c0_6, %c0_7] : memref<1x128xf32, #tpu.memory_space<vmem>>, vector<1x128xf32>
    %9 = vector.broadcast %8 : vector<1x128xf32> to vector<8x128xf32>
    %10 = arith.mulf %7, %9 : vector<8x128xf32>
    %cst_8 = arith.constant dense<0.000000e+00> : vector<8xf32>
    %11 = vector.multi_reduction <add>, %10, %cst_8 [1] : vector<8x128xf32> to vector<8xf32>
    %12 = vector.shape_cast %11 : vector<8xf32> to vector<8x1xf32>
    %c0_9 = arith.constant 0 : index
    %c0_10 = arith.constant 0 : index
    %13 = memref.load %arg5[%c0_9, %c0_10] : memref<1x1xf32, #tpu.memory_space<smem>>
    %14 = vector.broadcast %13 : f32 to vector<8x1xf32>
    %15 = arith.addf %12, %14 : vector<8x1xf32>
    %16 = arith.negf %15 : vector<8x1xf32>
    %17 = math.exp %16 : vector<8x1xf32>
    %cst_11 = arith.constant 1.000000e+00 : f32
    %18 = vector.broadcast %cst_11 : f32 to vector<8x1xf32>
    %19 = arith.addf %18, %17 : vector<8x1xf32>
    %20 = arith.divf %18, %19 : vector<8x1xf32>
    %c0_12 = arith.constant 0 : index
    %c0_13 = arith.constant 0 : index
    %21 = vector.load %arg6[%c0_12, %c0_13] : memref<8x1xf32, #tpu.memory_space<vmem>>, vector<8x1xf32>
    tpu.vector_store %arg6[%c0_12, %c0_13], %20 {strides = array<i32>} : memref<8x1xf32, #tpu.memory_space<vmem>>, vector<8x1xf32>,
    return
  }
  func.func @transform_0(%arg0: i32) -> (i32, i32) {
    %c0_i32 = arith.constant 0 : i32
    %c0_i32_0 = arith.constant 0 : i32
    return %arg0, %c0_i32 : i32, i32
  }
  func.func @transform_1(%arg0: i32) -> (i32, i32) {
    %c0_i32 = arith.constant 0 : i32
    %c0_i32_0 = arith.constant 0 : i32
    %c0_i32_1 = arith.constant 0 : i32
    return %c0_i32, %c0_i32_0 : i32, i32
  }
  func.func @transform_2(%arg0: i32) -> (i32, i32) {
    %c0_i32 = arith.constant 0 : i32
    %c0_i32_0 = arith.constant 0 : i32
    %c0_i32_1 = arith.constant 0 : i32
    return %c0_i32, %c0_i32_0 : i32, i32
  }
  func.func @transform_3(%arg0: i32) -> (i32, i32) {
    %c0_i32 = arith.constant 0 : i32
    %c0_i32_0 = arith.constant 0 : i32
    %c0_i32_1 = arith.constant 0 : i32
    return %c0_i32, %c0_i32_0 : i32, i32
  }
  func.func @transform_4(%arg0: i32) -> (i32, i32) {
    %c0_i32 = arith.constant 0 : i32
    %c0_i32_0 = arith.constant 0 : i32
    %c0_i32_1 = arith.constant 0 : i32
    return %c0_i32, %c0_i32_0 : i32, i32
  }
  func.func @transform_5(%arg0: i32) -> (i32, i32) {
    %c0_i32 = arith.constant 0 : i32
    %c0_i32_0 = arith.constant 0 : i32
    return %arg0, %c0_i32 : i32, i32
  }
}

</mosaic_0001>

<llo_original>
// kernel: _forward_impl.1
$region0: #{_forward_impl.1}
  #allocation0 [shape = 'u32[]', space=smem, size = 0x4, offset = 0x4, fixed_abs, tag = 'smem constant byte address 0x4 - core index']
  #allocation1 [shape = 'u32[144,128]{1,0:T(1,128)}', space=vmem, size = 0x12000, scoped, tag = 'internal scratch']
  #allocation2 [shape = 'f32[1,1]{1,0:T(1,128)S(6)}', space=smem, size = 0x200, scoped, tag = 'scoped memory for _forward_impl.1']
  %s0 = inlined_call_operand.vmem [shape: f32[8,32], index: 0, kind: input, shape index: {}]
  %s1 = inlined_call_operand.vmem [shape: f32[32,128], index: 1, kind: input, shape index: {}]
  %s2 = inlined_call_operand.vmem [shape: f32[1,128], index: 2, kind: input, shape index: {}]
  %s3 = inlined_call_operand.vmem [shape: f32[1,128], index: 3, kind: input, shape index: {}]
  %s4 = inlined_call_operand.<no memory space> [shape: f32[1,1], index: 4, kind: input, shape index: {}]
  %s5 = inlined_call_operand.vmem [shape: f32[8,1], index: 5, kind: output, shape index: {}]
  %s6 = sld [smem:[#allocation0]]
  $region30: #{_forward_impl.1} parent=0
    _
  %s8 = ssub.s32 1, %s6
  %s9 = scalar_select 0, %s8, %s6
  %10 = sst [smem:[#allocation2]] %s4
  // Predicated region
  $region2: #{_forward_impl.1} parent=0 // pred_check
    _
  $region3: #{_forward_impl.1} parent=0 // pred_check_branch
    %12 = sbr.rel (0) target = $region5
  $region4: #{_forward_impl.1} parent=0 // pred_region
    _
  $region5: #{_forward_impl.1} parent=0 // pred_fallthru
    _
  // Predicated region
  $region6: #{_forward_impl.1} parent=0 // pred_check
    _
  $region7: #{_forward_impl.1} parent=0 // pred_check_branch
    %14 = sbr.rel (0) target = $region9
  $region8: #{_forward_impl.1} parent=0 // pred_region
    _
  $region9: #{_forward_impl.1} parent=0 // pred_fallthru
    _
  // Predicated region
  $region10: #{_forward_impl.1} parent=0 // pred_check
    _
  $region11: #{_forward_impl.1} parent=0 // pred_check_branch
    %16 = sbr.rel (0) target = $region13
  $region12: #{_forward_impl.1} parent=0 // pred_region
    _
  $region13: #{_forward_impl.1} parent=0 // pred_fallthru
    _
  // Predicated region
  $region14: #{_forward_impl.1} parent=0 // pred_check
    _
  $region15: #{_forward_impl.1} parent=0 // pred_check_branch
    %18 = sbr.rel (0) target = $region17
  $region16: #{_forward_impl.1} parent=0 // pred_region
    _
  $region17: #{_forward_impl.1} parent=0 // pred_fallthru
    _
  // Predicated region
  $region18: #{_forward_impl.1} parent=0 // pred_check
    _
  $region19: #{_forward_impl.1} parent=0 // pred_check_branch
    %20 = sbr.rel (0) target = $region21
  $region20: #{_forward_impl.1} parent=0 // pred_region
    _
  $region21: #{_forward_impl.1} parent=0 // pred_fallthru
    _
  %v21 = vld [vmem:[%s0] sm:$0xff]
  %v22 = vld [vmem:[%s1] sm:$0xff]
  %v23 = vld [vmem:[%s1 + $0x8] sm:$0xff]
  %v24 = vld [vmem:[%s1 + $0x10] sm:$0xff]
  %v25 = vld [vmem:[%s1 + $0x18] sm:$0xff]
  %v26 = vld [vmem:[%s2] sm:$0x1]
  %v28 = vlaneseq
  %v29 = vshrl.u32 %v28, 7
  %v30 = vsub.s32 0, %v29
  %v31 = vrot.slane %v26, %v30
  %vm33 = vcmask 261120
  %v35 = vsel %vm33, %v21, 0
  %37 = vmatprep.subr.mxu0 0.0
  %38 = vmatpush1.msra.mxu0 0.0
  %39 = vmatprep.subr.mxu0 0.0
  %40 = vmatpush1.msra.mxu0 0.0
  %41 = vmatprep.subr.mxu0 0.0
  %42 = vmatpush1.msra.mxu0 0.0
  %43 = vmatprep.subr.mxu0 0.0
  %44 = vmatpush1.msra.mxu0 0.0
  %45 = vmatprep.subr.mxu0 0.0
  %46 = vmatpush1.msra.mxu0 0.0
  %47 = vmatprep.subr.mxu0 0.0
  %48 = vmatpush1.msra.mxu0 0.0
  %49 = vmatprep.subr.mxu0 0.0
  %50 = vmatpush1.msra.mxu0 0.0
  %51 = vmatprep.subr.mxu0 0.0
  %52 = vmatpush1.msra.mxu0 0.0
  %53 = vmatprep.subr.mxu0 0.0
  %54 = vmatpush1.msra.mxu0 0.0
  %55 = vmatprep.subr.mxu0 0.0
  %56 = vmatpush1.msra.mxu0 0.0
  %57 = vmatprep.subr.mxu0 0.0
  %58 = vmatpush1.msra.mxu0 0.0
  %59 = vmatprep.subr.mxu0 0.0
  %60 = vmatpush1.msra.mxu0 0.0
  %61 = vmatprep.subr.mxu0 0.0
  %62 = vmatpush1.msra.mxu0 %v25
  %63 = vmatprep.subr.mxu0 0.0
  %64 = vmatpush1.msra.mxu0 %v24
  %65 = vmatprep.subr.mxu0 0.0
  %66 = vmatpush1.msra.mxu0 %v23
  %67 = vmatprep.subr.mxu0 0.0
  %68 = vmatpush1.msra.mxu0 %v22
  %69 = vmatprep.subr.mxu0 0.0
  %70 = vmatpush2.msra.mxu0 0.0
  %71 = vmatprep.subr.mxu0 0.0
  %72 = vmatpush2.msra.mxu0 0.0
  %73 = vmatprep.subr.mxu0 0.0
  %74 = vmatpush2.msra.mxu0 0.0
  %75 = vmatprep.subr.mxu0 0.0
  %76 = vmatpush2.msra.mxu0 0.0
  %77 = vmatprep.subr.mxu0 0.0
  %78 = vmatpush2.msra.mxu0 0.0
  %79 = vmatprep.subr.mxu0 0.0
  %80 = vmatpush2.msra.mxu0 0.0
  %81 = vmatprep.subr.mxu0 0.0
  %82 = vmatpush2.msra.mxu0 0.0
  %83 = vmatprep.subr.mxu0 0.0
  %84 = vmatpush2.msra.mxu0 0.0
  %85 = vmatprep.subr.mxu0 0.0
  %86 = vmatpush2.msra.mxu0 0.0
  %87 = vmatprep.subr.mxu0 0.0
  %88 = vmatpush2.msra.mxu0 0.0
  %89 = vmatprep.subr.mxu0 0.0
  %90 = vmatpush2.msra.mxu0 0.0
  %91 = vmatprep.subr.mxu0 0.0
  %92 = vmatpush2.msra.mxu0 0.0
  %93 = vmatprep.subr.mxu0 0.0
  %94 = vmatpush2.msra.mxu0 0.0
  %95 = vmatprep.subr.mxu0 0.0
  %96 = vmatpush2.msra.mxu0 0.0
  %97 = vmatprep.subr.mxu0 0.0
  %98 = vmatpush2.msra.mxu0 0.0
  %99 = vmatprep.subr.mxu0 0.0
  %100 = vmatpush2.msra.mxu0 0.0
  %101 = vmatprep.mubr.f32.mxu0 0.0
  %102 = vmatmul.mubr.f32.gmra.mxu0 %v35
  %v103 = vpop.f32.mrf.mxu0
  %v104 = vadd.f32 %v31, %v103
  %v105 = vpop.f32.mrf.mxu0
  %106 = vdwg.mxu0
  %v107 = vmax.f32 %v104, 0.0
  %v108 = vld [vmem:[%s3] sm:$0x1]
  %v110 = vlaneseq
  %v111 = vshrl.u32 %v110, 7
  %v112 = vsub.s32 0, %v111
  %v113 = vrot.slane %v108, %v112
  %v115 = vmul.f32 %v107, %v113
  %116 = vadd.xlane.f32.xlu0 %v115
  %v117 = vpop.xlane.xlu0 %116
  %s118 = sld [smem:[#allocation2]]
  %v119 = vstv %s118
  %v120 = vadd.f32 %v117, %v119
  %v121 = vxor.u32 %v120, 2147483648
  %v122 = vmul.f32 %v121, 1.442695
  %v123 = vpow.pop %v122
  %v124 = vadd.f32 %v123, 1.0
  %v125 = vrcp.pop %v124
  %v126 = vmul.f32 1.0, %v125
  %vm127 = vcmask 7168
  %128 = vst.msk [vmem:[%s5] sm:$0xff] %vm127, %v126
  // Predicated region
  $region22: #{_forward_impl.1} parent=0 // pred_check
    _
  $region23: #{_forward_impl.1} parent=0 // pred_check_branch
    %130 = sbr.rel (0) target = $region25
  $region24: #{_forward_impl.1} parent=0 // pred_region
    _
  $region25: #{_forward_impl.1} parent=0 // pred_fallthru
    _
  // Predicated region
  $region26: #{_forward_impl.1} parent=0 // pred_check
    _
  $region27: #{_forward_impl.1} parent=0 // pred_check_branch
    %132 = sbr.rel (0) target = $region29
  $region28: #{_forward_impl.1} parent=0 // pred_region
    _
  $region29: #{_forward_impl.1} parent=0 // pred_fallthru
    _

</llo_original>
